<compile_context>
chip_gen: v6e
topology: v6e:2x2x1
jax: 0.10.0
libtpu: 0.0.40
codegen_flags: <defaults>
</compile_context>

<pallas_src>
import jax
import jax.numpy as jnp
from jax.experimental import pallas as pl
from jax.experimental.pallas import tpu as pltpu


def _nlinear_kernel(x_ref, w_ref, b_ref, o_ref):
    # x_ref: (L, TC)   one batch element: time on sublanes, channels on lanes
    # w_ref: (P, L)    weight; constant block index -> fetched once, VMEM-resident
    # b_ref: (P, 1)    bias column (broadcasts across channel lanes)
    # o_ref: (P, TC)   one batch element of the output, channels on lanes
    x = x_ref[...]
    L = x.shape[0]
    seq_last = x[L - 1:L, :]                       # (1, TC) last time step per channel
    xd = x - seq_last                              # normalize (operand dtype)
    # [P, L] @ [L, TC] on the MXU, f32 accumulation.
    y = jnp.dot(w_ref[...], xd, preferred_element_type=jnp.float32)
    # Epilogue arithmetic is free filler under the DMA-bound regime.
    y = y + b_ref[...] + seq_last.astype(jnp.float32)
    o_ref[...] = y.astype(o_ref.dtype)


def _pick_channel_tile(C, channel_tile):
    if channel_tile is not None:
        return channel_tile
    # Full extent (always layout-legal; grid_c == 1 -> x streamed exactly once)
    # unless C is huge, then a lane-aligned tile bounds the VMEM footprint.
    return C if C <= 1024 else 512


def nlinear_forward(x, weight, bias, *, mxu_dtype=jnp.bfloat16, channel_tile=None):
    """NLinear forward (individual=False).

    x: [B, L, C], weight: [P, L], bias: [P] -> [B, P, C]

    mxu_dtype: dtype for the matmul operands (cast once, in the wrapper).
      Default bf16 = native MXU path on v5e/v6e/v7x (f32 accumulation kept).
      Pass None for an exact f32 path (tight-tolerance checks).
    """
    B, L, C = x.shape
    P = weight.shape[0]
    out_dtype = x.dtype

    if mxu_dtype is not None:
        # Cast once in HBM (fuses with the producer of x in a larger graph):
        # halves the dominant x DMA bytes and avoids re-packing the resident
        # weight tile on the VPU every grid step.
        x = x.astype(mxu_dtype)
        weight = weight.astype(mxu_dtype)
    b_col = bias.astype(jnp.float32).reshape(P, 1)

    TC = _pick_channel_tile(C, channel_tile)
    grid_c = pl.cdiv(C, TC)

    return pl.pallas_call(
        _nlinear_kernel,
        out_shape=jax.ShapeDtypeStruct((B, P, C), out_dtype),
        grid_spec=pltpu.PrefetchScalarGridSpec(
            num_scalar_prefetch=0,
            grid=(B, grid_c),
            in_specs=[
                # x: one batch element per step, channels lane-tiled; batch squeezed.
                pl.BlockSpec((None, L, TC), lambda b, c: (b, 0, c)),
                # W: constant block index -> DMA'd once, stays VMEM-resident
                # (with a constant index the second pipeline buffer is never refilled).
                pl.BlockSpec((P, L), lambda b, c: (0, 0)),
                pl.BlockSpec((P, 1), lambda b, c: (0, 0)),
            ],
            out_specs=pl.BlockSpec((None, P, TC), lambda b, c: (b, 0, c)),
        ),
        compiler_params=pltpu.CompilerParams(
            dimension_semantics=("parallel", "parallel"),
            # Raise v5e's 16 MiB scoped-VMEM default so the exact-f32 path with
            # full-C tiles also fits; 32 MiB is already the default on v6e/v7x.
            vmem_limit_bytes=32 * 1024 * 1024,
        ),
    )(x, weight, b_col)


def nlinear_reference(x, weight, bias):
    seq_last = x[:, -1:, :]
    xd = x - seq_last
    # torch: Linear(xd.permute(0,2,1)).permute(0,2,1)
    y = jnp.einsum("pl,blc->bpc", weight, xd,
                   precision=jax.lax.Precision.HIGHEST) + bias[None, :, None]
    return y + seq_last


if __name__ == "__main__":
    # --- Small exact check (f32 MXU path): seq_len=16, pred_len=8, C=4, B=2 ---
    B, L, P, C = 2, 16, 8, 4
    kx, kw, kb = jax.random.split(jax.random.PRNGKey(0), 3)
    x = jax.random.normal(kx, (B, L, C), dtype=jnp.float32)
    bound = 1.0 / (L ** 0.5)   # nn.Linear-style U(-1/sqrt(in), 1/sqrt(in))
    w = jax.random.uniform(kw, (P, L), jnp.float32, -bound, bound)
    b = jax.random.uniform(kb, (P,), jnp.float32, -bound, bound)

    out = jax.block_until_ready(nlinear_forward(x, w, b, mxu_dtype=None))
    ref = nlinear_reference(x, w, b)
    assert out.shape == (B, P, C)
    assert jnp.allclose(out, ref, atol=1e-5, rtol=1e-5), "f32 mismatch (small)"

    # --- Medium check: L,P >= 128, C not a multiple of 128, forced channel
    #     tiling (channel_tile=128 -> grid_c=2 with a masked 32-lane tail). ---
    B2, L2, P2, C2 = 3, 128, 192, 160
    kx2, kw2, kb2 = jax.random.split(jax.random.PRNGKey(1), 3)
    x2 = jax.random.normal(kx2, (B2, L2, C2), dtype=jnp.float32)
    bound2 = 1.0 / (L2 ** 0.5)
    w2 = jax.random.uniform(kw2, (P2, L2), jnp.float32, -bound2, bound2)
    b2 = jax.random.uniform(kb2, (P2,), jnp.float32, -bound2, bound2)
    ref2 = nlinear_reference(x2, w2, b2)

    out2_f32 = jax.block_until_ready(
        nlinear_forward(x2, w2, b2, mxu_dtype=None, channel_tile=128))
    assert jnp.allclose(out2_f32, ref2, atol=1e-4, rtol=1e-4), "f32 mismatch (tiled)"

    out2_bf16 = jax.block_until_ready(nlinear_forward(x2, w2, b2))  # default bf16 MXU path
    assert jnp.allclose(out2_bf16, ref2, atol=5e-2, rtol=5e-2), "bf16 mismatch"

    print("KERNEL_OK")
</pallas_src>

<mosaic_0001>
module attributes {stable_mosaic.version = 11 : i64} {
  func.func @_nlinear_kernel(%arg0: i32, %arg1: i32, %arg2: memref<1x16x4xf32, #tpu.memory_space<vmem>>, %arg3: memref<8x16xf32, #tpu.memory_space<vmem>>, %arg4: memref<8x1xf32, #tpu.memory_space<vmem>>, %arg5: memref<1x8x4xf32, #tpu.memory_space<vmem>>) attributes {dimension_semantics = [#tpu.dimension_semantics<parallel>, #tpu.dimension_semantics<parallel>], iteration_bounds = array<i64: 2, 1>, scalar_prefetch = 0 : i64, scratch_operands = 0 : i64, tpu.core_type = #tpu.core_type<tc>, window_params = [{transform_indices = @transform_0, window_bounds = array<i64: 1, 16, 4>}, {pipeline_mode = #tpu.pipeline_mode<synchronous>, transform_indices = @transform_1, window_bounds = array<i64: 8, 16>}, {pipeline_mode = #tpu.pipeline_mode<synchronous>, transform_indices = @transform_2, window_bounds = array<i64: 8, 1>}, {transform_indices = @transform_3, window_bounds = array<i64: 1, 8, 4>}]} {
    %c0 = arith.constant 0 : index
    %c0_0 = arith.constant 0 : index
    %c0_1 = arith.constant 0 : index
    %0 = vector.load %arg2[%c0, %c0_0, %c0_1] : memref<1x16x4xf32, #tpu.memory_space<vmem>>, vector<1x16x4xf32>
    %1 = vector.shape_cast %0 : vector<1x16x4xf32> to vector<16x4xf32>
    %2 = vector.extract_strided_slice %1 {offsets = [15, 0], sizes = [1, 4], strides = [1, 1]} : vector<16x4xf32> to vector<1x4xf32>
    %3 = vector.broadcast %2 : vector<1x4xf32> to vector<16x4xf32>
    %4 = arith.subf %1, %3 : vector<16x4xf32>
    %c0_2 = arith.constant 0 : index
    %c0_3 = arith.constant 0 : index
    %5 = vector.load %arg3[%c0_2, %c0_3] : memref<8x16xf32, #tpu.memory_space<vmem>>, vector<8x16xf32>
    %cst = arith.constant dense<0.000000e+00> : vector<8x4xf32>
    %6 = tpu.matmul %5, %4, %cst {dimension_numbers = #tpu.dot_dimension_numbers<[1], [0], [0], [1], [0, 0, 1, 1], [], []>} : vector<8x16xf32>, vector<16x4xf32>, vector<8x4xf32> -> vector<8x4xf32>
    %c0_4 = arith.constant 0 : index
    %c0_5 = arith.constant 0 : index
    %7 = vector.load %arg4[%c0_4, %c0_5] : memref<8x1xf32, #tpu.memory_space<vmem>>, vector<8x1xf32>
    %8 = vector.broadcast %7 : vector<8x1xf32> to vector<8x4xf32>
    %9 = arith.addf %6, %8 : vector<8x4xf32>
    %10 = vector.broadcast %2 : vector<1x4xf32> to vector<8x4xf32>
    %11 = arith.addf %9, %10 : vector<8x4xf32>
    %c0_6 = arith.constant 0 : index
    %c0_7 = arith.constant 0 : index
    %c0_8 = arith.constant 0 : index
    %12 = vector.load %arg5[%c0_6, %c0_7, %c0_8] : memref<1x8x4xf32, #tpu.memory_space<vmem>>, vector<1x8x4xf32>
    %13 = vector.shape_cast %12 : vector<1x8x4xf32> to vector<8x4xf32>
    %14 = vector.shape_cast %11 : vector<8x4xf32> to vector<1x8x4xf32>
    tpu.vector_store %arg5[%c0_6, %c0_7, %c0_8], %14 {strides = array<i32>} : memref<1x8x4xf32, #tpu.memory_space<vmem>>, vector<1x8x4xf32>,
    return
  }
  func.func @transform_0(%arg0: i32, %arg1: i32) -> (i32, i32, i32) {
    %c0_i32 = arith.constant 0 : i32
    %c0_i32_0 = arith.constant 0 : i32
    return %arg0, %c0_i32, %arg1 : i32, i32, i32
  }
  func.func @transform_1(%arg0: i32, %arg1: i32) -> (i32, i32) {
    %c0_i32 = arith.constant 0 : i32
    %c0_i32_0 = arith.constant 0 : i32
    %c0_i32_1 = arith.constant 0 : i32
    return %c0_i32, %c0_i32_0 : i32, i32
  }
  func.func @transform_2(%arg0: i32, %arg1: i32) -> (i32, i32) {
    %c0_i32 = arith.constant 0 : i32
    %c0_i32_0 = arith.constant 0 : i32
    %c0_i32_1 = arith.constant 0 : i32
    return %c0_i32, %c0_i32_0 : i32, i32
  }
  func.func @transform_3(%arg0: i32, %arg1: i32) -> (i32, i32, i32) {
    %c0_i32 = arith.constant 0 : i32
    %c0_i32_0 = arith.constant 0 : i32
    return %arg0, %c0_i32, %arg1 : i32, i32, i32
  }
}

</mosaic_0001>

<llo_original>
// kernel: tpu_custom_call.1
$region0: #{tpu_custom_call.1}
  #allocation0 [shape = 'u32[]', space=smem, size = 0x4, offset = 0x4, fixed_abs, tag = 'smem constant byte address 0x4 - core index']
  #allocation1 [shape = 'u32[144,128]{1,0:T(1,128)}', space=vmem, size = 0x12000, scoped, tag = 'internal scratch']
  %s0 = inlined_call_operand.vmem [shape: f32[2,16,4], index: 0, kind: input, shape index: {}]
  %s1 = inlined_call_operand.vmem [shape: f32[8,16], index: 1, kind: input, shape index: {}]
  %s2 = inlined_call_operand.vmem [shape: f32[8,1], index: 2, kind: input, shape index: {}]
  %s3 = inlined_call_operand.vmem [shape: f32[2,8,4], index: 3, kind: output, shape index: {}]
  %s4 = sld [smem:[#allocation0]]
  $region45: #{tpu_custom_call.1} parent=0
    _
  %s6 = ssub.s32 1, %s4
  %s7 = scalar_select 0, %s6, %s4
  loop: start=0, step=1, limit=4
  $region2: #{tpu_custom_call.1} parent=0 // loop_pre_header
    _
  $region3: #{tpu_custom_call.1} parent=0 // loop_header
    %s9 = sphi 0, %s13
    %p10 = scmp.ge.s32.totalorder %s9, 4
    %s16 = sphi 0, %s28
    %s17 = sphi 0, %s24
    %s18 = sphi 0, %s16
    %s19 = sphi 0, %s17
    %s20 = sphi 0, %s18
    %s21 = sphi 0, %s19
    %s33 = sphi 0, %s35
    %s36 = sphi 0, %s33
    %s37 = sphi 0, %s36
    %s53 = sphi 0, %s37
    %s57 = sphi 0, %s57
    %s59 = sphi 0, %s57
    %s60 = sphi 0, %s59
    %s74 = sphi 0, %s60
    %s78 = sphi 0, %s78
    %s80 = sphi 0, %s78
    %s81 = sphi 0, %s80
    %s95 = sphi 0, %s81
    %s103 = sphi 0, %s105
    %s106 = sphi 0, %s103
    %s107 = sphi 0, %s106
    %s123 = sphi 0, %s107
  $region4: #{tpu_custom_call.1} parent=0 // loop_header_branch
    %12 = sbr.rel (%p10) target = $region8
  $region5: #{tpu_custom_call.1} parent=0 // loop_body
    %s14 = ssub.s32 %s9, 1
    %s15 = ssub.s32 %s9, 2
    %s22 = sadd.s32 1, %s17
    %p23 = scmp.ge.s32.totalorder %s22, 1
    %s24 = scalar_select %p23, 0, %s22
    %s25 = sadd.s32 1, %s16
    %s26 = scalar_select %p23, %s25, %s16
    %p27 = scmp.ge.s32.totalorder %s26, 2
    %s28 = scalar_select %p27, 0, %s26
    %s29 = ssub.s32 %s16, %s28
    %s30 = ssub.s32 %s17, %s24
    %s31 = sor.u32 %s29, %s30
    %p32 = scmp.eq.s32.totalorder %s31, 0
    %s34 = sadd.s32 %s33, 1
    %s35 = scalar_select %p32, %s33, %s34
    %p38 = pneg %p32
    %p39 = scmp.eq.s32.totalorder %s9, 1
    %p40 = por %p38, %p39
    %p41 = scmp.ne.s32.totalorder %s33, %s36
    %p42 = scmp.eq.s32.totalorder %s9, 0
    %p43 = por %p41, %p42
    %p44 = scmp.ne.s32.totalorder %s33, %s36
    %p45 = scmp.eq.s32.totalorder %s14, 1
    %p46 = por %p44, %p45
    %p47 = scmp.ne.s32.totalorder %s36, %s37
    %p48 = scmp.eq.s32.totalorder %s14, 0
    %p49 = por %p47, %p48
    %p50 = scmp.ne.s32.totalorder %s36, %s37
    %p51 = scmp.eq.s32.totalorder %s15, 1
    %p52 = por %p50, %p51
    %p54 = scmp.ne.s32.totalorder %s37, %s53
    %p55 = scmp.eq.s32.totalorder %s15, 0
    %p56 = por %p54, %p55
    %s58 = sadd.s32 %s57, 1
    %p61 = scmp.eq.s32.totalorder %s9, 1
    %p62 = scmp.ne.s32.totalorder %s57, %s59
    %p63 = scmp.eq.s32.totalorder %s9, 0
    %p64 = por %p62, %p63
    %p65 = scmp.ne.s32.totalorder %s57, %s59
    %p66 = scmp.eq.s32.totalorder %s14, 1
    %p67 = por %p65, %p66
    %p68 = scmp.ne.s32.totalorder %s59, %s60
    %p69 = scmp.eq.s32.totalorder %s14, 0
    %p70 = por %p68, %p69
    %p71 = scmp.ne.s32.totalorder %s59, %s60
    %p72 = scmp.eq.s32.totalorder %s15, 1
    %p73 = por %p71, %p72
    %p75 = scmp.ne.s32.totalorder %s60, %s74
    %p76 = scmp.eq.s32.totalorder %s15, 0
    %p77 = por %p75, %p76
    %s79 = sadd.s32 %s78, 1
    %p82 = scmp.eq.s32.totalorder %s9, 1
    %p83 = scmp.ne.s32.totalorder %s78, %s80
    %p84 = scmp.eq.s32.totalorder %s9, 0
    %p85 = por %p83, %p84
    %p86 = scmp.ne.s32.totalorder %s78, %s80
    %p87 = scmp.eq.s32.totalorder %s14, 1
    %p88 = por %p86, %p87
    %p89 = scmp.ne.s32.totalorder %s80, %s81
    %p90 = scmp.eq.s32.totalorder %s14, 0
    %p91 = por %p89, %p90
    %p92 = scmp.ne.s32.totalorder %s80, %s81
    %p93 = scmp.eq.s32.totalorder %s15, 1
    %p94 = por %p92, %p93
    %p96 = scmp.ne.s32.totalorder %s81, %s95
    %p97 = scmp.eq.s32.totalorder %s15, 0
    %p98 = por %p96, %p97
    %s99 = ssub.s32 %s16, %s28
    %s100 = ssub.s32 %s17, %s24
    %s101 = sor.u32 %s99, %s100
    %p102 = scmp.eq.s32.totalorder %s101, 0
    %s104 = sadd.s32 %s103, 1
    %s105 = scalar_select %p102, %s103, %s104
    %p108 = pneg %p102
    %p109 = scmp.eq.s32.totalorder %s9, 1
    %p110 = por %p108, %p109
    %p111 = scmp.ne.s32.totalorder %s103, %s106
    %p112 = scmp.eq.s32.totalorder %s9, 0
    %p113 = por %p111, %p112
    %p114 = scmp.ne.s32.totalorder %s103, %s106
    %p115 = scmp.eq.s32.totalorder %s14, 1
    %p116 = por %p114, %p115
    %p117 = scmp.ne.s32.totalorder %s106, %s107
    %p118 = scmp.eq.s32.totalorder %s14, 0
    %p119 = por %p117, %p118
    %p120 = scmp.ne.s32.totalorder %s106, %s107
    %p121 = scmp.eq.s32.totalorder %s15, 1
    %p122 = por %p120, %p121
    %p124 = scmp.ne.s32.totalorder %s107, %s123
    %p125 = scmp.eq.s32.totalorder %s15, 0
    %p126 = por %p124, %p125
    %p127 = scmp.le.s32.totalorder 1, %s9
    %p128 = scmp.lt.s32.totalorder %s9, 3
    %p129 = pnand %p127, %p128
    %p130 = pneg %p129
    // Predicated region
    $region9: #{tpu_custom_call.1} parent=5 // pred_check
      _
    $region10: #{tpu_custom_call.1} parent=5 // pred_check_branch
      %132 = sbr.rel (%p129) target = $region12
    $region11: #{tpu_custom_call.1} parent=5 // pred_region
      %s133 = ssub.s32 %s9, 1
      // Predicated region
      $region13: #{tpu_custom_call.1} parent=11 // pred_check
        %p134 = pneg %p70
      $region14: #{tpu_custom_call.1} parent=11 // pred_check_branch
        %136 = sbr.rel (%p134) target = $region16
      $region15: #{tpu_custom_call.1} parent=11 // pred_region
        _
      $region16: #{tpu_custom_call.1} parent=11 // pred_fallthru
        _
      // Predicated region
      $region17: #{tpu_custom_call.1} parent=11 // pred_check
        %p137 = pneg %p91
      $region18: #{tpu_custom_call.1} parent=11 // pred_check_branch
        %139 = sbr.rel (%p137) target = $region20
      $region19: #{tpu_custom_call.1} parent=11 // pred_region
        _
      $region20: #{tpu_custom_call.1} parent=11 // pred_fallthru
        _
    $region12: #{tpu_custom_call.1} parent=5 // pred_fallthru
      _
    %p140 = scmp.lt.s32.totalorder %s9, 2
    // Predicated region
    $region21: #{tpu_custom_call.1} parent=5 // pred_check
      %p141 = pneg %p140
    $region22: #{tpu_custom_call.1} parent=5 // pred_check_branch
      %143 = sbr.rel (%p141) target = $region24
    $region23: #{tpu_custom_call.1} parent=5 // pred_region
      // Predicated region
      $region25: #{tpu_custom_call.1} parent=23 // pred_check
        %p144 = pneg %p43
      $region26: #{tpu_custom_call.1} parent=23 // pred_check_branch
        %146 = sbr.rel (%p144) target = $region28
      $region27: #{tpu_custom_call.1} parent=23 // pred_region
        %p147 = scmp.lt.s32.totalorder %s16, 1
        %s148 = scalar_select %p147, %s16, 1
        %p149 = scmp.lt.s32.totalorder %s17, 0
        %s150 = scalar_select %p149, %s17, 0
        %s151 = smul.addr %s148, 2
        %s152 = sadd.s32 %s150, %s151
        %s153 = smul.addr %s152, 8
        %s154 = scalar_lea.vmem %s0, %s153
      $region28: #{tpu_custom_call.1} parent=23 // pred_fallthru
        _
    $region24: #{tpu_custom_call.1} parent=5 // pred_fallthru
      _
    %p155 = scmp.le.s32.totalorder 1, %s9
    %p156 = scmp.lt.s32.totalorder %s9, 3
    %p157 = pnand %p155, %p156
    %p158 = pneg %p157
    // Predicated region
    $region29: #{tpu_custom_call.1} parent=5 // pred_check
      _
    $region30: #{tpu_custom_call.1} parent=5 // pred_check_branch
      %160 = sbr.rel (%p157) target = $region32
    $region31: #{tpu_custom_call.1} parent=5 // pred_region
      %s161 = ssub.s32 %s9, 1
      %p162 = scmp.lt.s32.totalorder %s18, 1
      %s163 = scalar_select %p162, %s18, 1
      %p164 = scmp.lt.s32.totalorder %s19, 0
      %s165 = scalar_select %p164, %s19, 0
      %s166 = smul.addr %s163, 2
      %s167 = sadd.s32 %s165, %s166
      %s168 = smul.addr %s167, 8
      %s169 = scalar_lea.vmem %s0, %s168
      %p170 = pneg %p49
      %p171 = pneg %p46
      %p172 = pneg %p70
      %p173 = pneg %p67
      %p174 = pneg %p91
      %p175 = pneg %p88
      %p176 = pneg %p119
      %p177 = pneg %p116
      %p178 = scmp.lt.s32.totalorder %s18, 1
      %s179 = scalar_select %p178, %s18, 1
      %p180 = scmp.lt.s32.totalorder %s19, 0
      %s181 = scalar_select %p180, %s19, 0
      %s182 = sadd.s32 %s181, %s179
      %s183 = smul.addr %s182, 8
      %s184 = scalar_lea.vmem %s3, %s183
      %p185 = scmp.lt.s32.totalorder %s18, 1
      %s186 = scalar_select %p185, %s18, 1
      %p187 = scmp.lt.s32.totalorder %s19, 0
      %s188 = scalar_select %p187, %s19, 0
      %s189 = smul.addr %s186, 2
      %s190 = sadd.s32 %s188, %s189
      %s191 = smul.addr %s190, 8
      %s192 = scalar_lea.vmem %s0, %s191
      %p193 = scmp.lt.s32.totalorder %s18, 1
      %s194 = scalar_select %p193, %s18, 1
      %p195 = scmp.lt.s32.totalorder %s19, 0
      %s196 = scalar_select %p195, %s19, 0
      %s197 = sadd.s32 %s196, %s194
      %s198 = smul.addr %s197, 8
      %s199 = scalar_lea.vmem %s3, %s198
      %v200 = vld [vmem:[%s192] sm:$0xff]
      %v201 = vld [vmem:[%s192 + $0x8] sm:$0xff]
      %v202 = vlaneseq
      %v203 = vshrl.u32 %v202, 7
      %v204 = vsub.s32 7, %v203
      %v205 = vrot.slane %v201, %v204
      %v206 = vsub.f32 %v200, %v205
      %v207 = vsub.f32 %v201, %v205
      %v208 = vld [vmem:[%s1] sm:$0xff]
      %v209 = vld [vmem:[%s2] sm:$0xff]
      %211 = vset.pattern.permute.xlu0 0
      %212 = vperm.xlu0 %211, %v209
      %v213 = vpop.permute.xlu0 %212
      %vm215 = vcmask 130048
      %v217 = vsel %vm215, %v208, 0
      %219 = vmatprep.subr.mxu0 0.0
      %220 = vmatpush1.msra.mxu0 0.0
      %221 = vmatprep.subr.mxu0 0.0
      %222 = vmatpush1.msra.mxu0 0.0
      %223 = vmatprep.subr.mxu0 0.0
      %224 = vmatpush1.msra.mxu0 0.0
      %225 = vmatprep.subr.mxu0 0.0
      %226 = vmatpush1.msra.mxu0 0.0
      %227 = vmatprep.subr.mxu0 0.0
      %228 = vmatpush1.msra.mxu0 0.0
      %229 = vmatprep.subr.mxu0 0.0
      %230 = vmatpush1.msra.mxu0 0.0
      %231 = vmatprep.subr.mxu0 0.0
      %232 = vmatpush1.msra.mxu0 0.0
      %233 = vmatprep.subr.mxu0 0.0
      %234 = vmatpush1.msra.mxu0 0.0
      %235 = vmatprep.subr.mxu0 0.0
      %236 = vmatpush1.msra.mxu0 0.0
      %237 = vmatprep.subr.mxu0 0.0
      %238 = vmatpush1.msra.mxu0 0.0
      %239 = vmatprep.subr.mxu0 0.0
      %240 = vmatpush1.msra.mxu0 0.0
      %241 = vmatprep.subr.mxu0 0.0
      %242 = vmatpush1.msra.mxu0 0.0
      %243 = vmatprep.subr.mxu0 0.0
      %244 = vmatpush1.msra.mxu0 0.0
      %245 = vmatprep.subr.mxu0 0.0
      %246 = vmatpush1.msra.mxu0 0.0
      %247 = vmatprep.subr.mxu0 0.0
      %248 = vmatpush1.msra.mxu0 %v207
      %249 = vmatprep.subr.mxu0 0.0
      %250 = vmatpush1.msra.mxu0 %v206
      %251 = vmatprep.subr.mxu0 0.0
      %252 = vmatpush2.msra.mxu0 0.0
      %253 = vmatprep.subr.mxu0 0.0
      %254 = vmatpush2.msra.mxu0 0.0
      %255 = vmatprep.subr.mxu0 0.0
      %256 = vmatpush2.msra.mxu0 0.0
      %257 = vmatprep.subr.mxu0 0.0
      %258 = vmatpush2.msra.mxu0 0.0
      %259 = vmatprep.subr.mxu0 0.0
      %260 = vmatpush2.msra.mxu0 0.0
      %261 = vmatprep.subr.mxu0 0.0
      %262 = vmatpush2.msra.mxu0 0.0
      %263 = vmatprep.subr.mxu0 0.0
      %264 = vmatpush2.msra.mxu0 0.0
      %265 = vmatprep.subr.mxu0 0.0
      %266 = vmatpush2.msra.mxu0 0.0
      %267 = vmatprep.subr.mxu0 0.0
      %268 = vmatpush2.msra.mxu0 0.0
      %269 = vmatprep.subr.mxu0 0.0
      %270 = vmatpush2.msra.mxu0 0.0
      %271 = vmatprep.subr.mxu0 0.0
      %272 = vmatpush2.msra.mxu0 0.0
      %273 = vmatprep.subr.mxu0 0.0
      %274 = vmatpush2.msra.mxu0 0.0
      %275 = vmatprep.subr.mxu0 0.0
      %276 = vmatpush2.msra.mxu0 0.0
      %277 = vmatprep.subr.mxu0 0.0
      %278 = vmatpush2.msra.mxu0 0.0
      %279 = vmatprep.subr.mxu0 0.0
      %280 = vmatpush2.msra.mxu0 0.0
      %281 = vmatprep.subr.mxu0 0.0
      %282 = vmatpush2.msra.mxu0 0.0
      %283 = vmatprep.mubr.f32.mxu0 0.0
      %284 = vmatmul.mubr.f32.gmra.mxu0 %v217
      %v285 = vpop.f32.mrf.mxu0
      %v286 = vadd.f32 %v213, %v285
      %v287 = vpop.f32.mrf.mxu0
      %288 = vdwg.mxu0
      %v289 = vadd.f32 %v286, %v205
      %vm290 = vcmask 31744
      %291 = vst.msk [vmem:[%s199] sm:$0xff] %vm290, %v289
      %p292 = scmp.lt.s32.totalorder %s18, 1
      %s293 = scalar_select %p292, %s18, 1
      %p294 = scmp.lt.s32.totalorder %s19, 0
      %s295 = scalar_select %p294, %s19, 0
      %s296 = sadd.s32 %s295, %s293
      %s297 = smul.addr %s296, 8
      %s298 = scalar_lea.vmem %s3, %s297
      // Predicated region
      $region33: #{tpu_custom_call.1} parent=31 // pred_check
        %p299 = pneg %p116
      $region34: #{tpu_custom_call.1} parent=31 // pred_check_branch
        %301 = sbr.rel (%p299) target = $region36
      $region35: #{tpu_custom_call.1} parent=31 // pred_region
        _
      $region36: #{tpu_custom_call.1} parent=31 // pred_fallthru
        _
    $region32: #{tpu_custom_call.1} parent=5 // pred_fallthru
      _
    %p302 = scmp.le.s32.totalorder 2, %s9
    // Predicated region
    $region37: #{tpu_custom_call.1} parent=5 // pred_check
      %p303 = pneg %p302
    $region38: #{tpu_custom_call.1} parent=5 // pred_check_branch
      %305 = sbr.rel (%p303) target = $region40
    $region39: #{tpu_custom_call.1} parent=5 // pred_region
      %s306 = ssub.s32 %s9, 2
      // Predicated region
      $region41: #{tpu_custom_call.1} parent=39 // pred_check
        %p307 = pneg %p122
      $region42: #{tpu_custom_call.1} parent=39 // pred_check_branch
        %309 = sbr.rel (%p307) target = $region44
      $region43: #{tpu_custom_call.1} parent=39 // pred_region
        %p310 = scmp.lt.s32.totalorder %s20, 1
        %s311 = scalar_select %p310, %s20, 1
        %p312 = scmp.lt.s32.totalorder %s21, 0
        %s313 = scalar_select %p312, %s21, 0
        %s314 = sadd.s32 %s313, %s311
        %s315 = smul.addr %s314, 8
        %s316 = scalar_lea.vmem %s3, %s315
      $region44: #{tpu_custom_call.1} parent=39 // pred_fallthru
        _
    $region40: #{tpu_custom_call.1} parent=5 // pred_fallthru
      _
  $region6: #{tpu_custom_call.1} parent=0 // loop_footer
    %s13 = sadd.s32 1, %s9
  $region7: #{tpu_custom_call.1} parent=0 // loop_footer_branch
    %8 = sbr.rel target = $region3
  $region8: #{tpu_custom_call.1} parent=0 // loop_exit
    _

</llo_original>
